<compile_context>
chip_gen: v6e
topology: v6e:2x2x1
jax: 0.10.0
libtpu: 0.0.40
codegen_flags: <defaults>
</compile_context>

<pallas_src>
import functools

import jax
import jax.numpy as jnp
from jax.experimental import pallas as pl
from jax.experimental.pallas import tpu as pltpu


_ROWWISE_ACTS = ("softmax", "log_softmax")


# ---------------------------------------------------------------------------
# Activation (trace-time switch inside the kernel epilogue).
# ---------------------------------------------------------------------------
def _apply_activation(y, activation):
    if activation is None or activation == "none":
        return y
    if activation == "relu":
        return jnp.maximum(y, 0.0)
    if activation == "sigmoid":
        return jax.nn.sigmoid(y)
    if activation == "tanh":
        return jnp.tanh(y)
    if activation == "elu":
        return jax.nn.elu(y)
    if activation == "gelu":
        return jax.nn.gelu(y)
    if activation == "silu":
        return jax.nn.silu(y)
    if activation == "leaky_relu":
        return jax.nn.leaky_relu(y)
    if activation == "softmax":
        return jax.nn.softmax(y, axis=-1)       # tile must hold full (padded) N
    if activation == "log_softmax":
        return jax.nn.log_softmax(y, axis=-1)   # tile must hold full (padded) N
    raise ValueError(f"Invalid activation type {activation}.")


# ---------------------------------------------------------------------------
# Kernel: tiled matmul with f32 accumulator, fused bias + activation epilogue.
# ---------------------------------------------------------------------------
def _linear_act_kernel(*refs, activation, has_bias):
    if has_bias:
        x_ref, w_ref, b_ref, o_ref, acc_ref = refs
    else:
        x_ref, w_ref, o_ref, acc_ref = refs
        b_ref = None

    k = pl.program_id(2)

    @pl.when(k == 0)
    def _():
        acc_ref[...] = jnp.zeros_like(acc_ref)

    acc_ref[...] += jnp.dot(
        x_ref[...], w_ref[...], preferred_element_type=jnp.float32
    )

    @pl.when(k == pl.num_programs(2) - 1)
    def _():
        y = acc_ref[...]
        if has_bias:
            y = y + b_ref[...]            # bias already f32
        y = _apply_activation(y, activation)
        o_ref[...] = y.astype(o_ref.dtype)


# ---------------------------------------------------------------------------
# Tiling helpers.
# ---------------------------------------------------------------------------
def _round_up(x, m):
    return ((x + m - 1) // m) * m


def _pick_tile(dim, pref, align):
    """Pick a tile size (align-multiple).

    - If the (align-rounded) dim fits under `pref`, use one tile for the
      whole axis (always BlockSpec-legal, no padding beyond alignment).
    - Else prefer an align-multiple divisor of dim (no padding).
    - Else use `pref`; the caller zero-pads the axis up to a multiple of it.
    """
    pref = max(align, (pref // align) * align)
    padded = _round_up(dim, align)
    if padded <= pref:
        return padded
    t = pref
    while t >= align:
        if dim % t == 0:
            return t
        t -= align
    return pref


def _vmem_budget_bytes():
    """Generation-aware VMEM budget: ~75% of physical, capped at 100 MiB.

    -> ~96 MiB on v5e/v6e (128 MiB physical), ~48 MiB on v7x (64 MiB).
    Falls back to a v7x-safe 48 MiB if the query is unavailable.
    """
    try:
        cap = int(getattr(pltpu.get_tpu_info(), "vmem_capacity_bytes"))
        return min((cap * 3) // 4, 100 * 1024 * 1024)
    except Exception:
        return 48 * 1024 * 1024


# ---------------------------------------------------------------------------
# Wrapper
# ---------------------------------------------------------------------------
def linear_norm_activation(
    x, weight, bias=None, *, normalization=None, activation="relu",
    weight_transposed=False, compute_dtype=None,
    tm=1024, tn=1024, tk=512,
):
    """Forward pass of LinearNormActivation (default config: no norm).

    x:      (M, in_features)
    weight: (out_features, in_features) in PyTorch nn.Linear convention, or
            (in_features, out_features) if weight_transposed=True (preferred:
            transpose ONCE at parameter-prep time, not per call).
    bias:   (out_features,) or None.
    compute_dtype: optional MXU input dtype (e.g. jnp.bfloat16); accumulation
            stays f32, output dtype stays x.dtype.
    """
    if normalization is not None:
        # TODO(synk): batch/layer/instance norm fusion not implemented; the
        # module default (normalization=None) is what this kernel covers.
        raise NotImplementedError("normalization fusion not implemented")

    out_dtype = x.dtype
    M, K = x.shape
    if weight_transposed:
        K2, N = weight.shape
        wt = weight                       # already (K, N): lane-dense output
    else:
        N, K2 = weight.shape
        wt = jnp.transpose(weight)        # (K, N) — prefer hoisting this out
    assert K == K2

    rowwise = activation in _ROWWISE_ACTS

    if compute_dtype is not None:
        x = x.astype(compute_dtype)
        wt = wt.astype(compute_dtype)
    x_it = jnp.dtype(x.dtype).itemsize
    w_it = jnp.dtype(wt.dtype).itemsize
    o_it = jnp.dtype(out_dtype).itemsize
    m_align = 16 if x_it < 4 else 8       # bf16 sublane packing

    budget = _vmem_budget_bytes()

    # Tile selection.
    tm_ = _pick_tile(M, tm, m_align)
    tk_ = _pick_tile(K, tk, 128)
    if rowwise:
        tn_ = _round_up(N, 128)           # row-wise activation needs full N tile
        # TODO(synk): very large N could exceed VMEM here; a two-pass /
        # online softmax epilogue would remove this constraint.
    else:
        tn_ = _pick_tile(N, tn, 128)

    # Shrink tiles until the double-buffered footprint fits the VMEM budget:
    # 2*(x tile + W tile + bias) + 2*out tile + f32 accumulator.
    def _footprint(a, b, c):
        return (2 * (a * c * x_it + c * b * w_it + b * 4)
                + 2 * a * b * o_it + a * b * 4)

    while _footprint(tm_, tn_, tk_) > budget:
        if tm_ > m_align:
            tm_ = max(m_align, ((tm_ // 2) // m_align) * m_align)
        elif tk_ > 128:
            tk_ = max(128, ((tk_ // 2) // 128) * 128)
        elif (not rowwise) and tn_ > 128:
            tn_ = max(128, ((tn_ // 2) // 128) * 128)
        else:
            break

    Mp, Np, Kp = _round_up(M, tm_), _round_up(N, tn_), _round_up(K, tk_)

    # Bias handling: drop the operand entirely when bias is None, except for
    # row-wise activations with a padded feature dim (need -inf-ish pads so
    # the padded columns vanish from the softmax normalization).
    has_bias = bias is not None
    neg_pad = rowwise and Np > N
    if (not has_bias) and neg_pad:
        bias = jnp.zeros((N,), dtype=jnp.float32)
        has_bias = True

    # Zero-pad unaligned inputs to the tile grid (zeros contribute nothing to
    # the matmul; padded output rows/cols are sliced off below).
    if (Mp, Kp) != (M, K):
        x = jnp.pad(x, ((0, Mp - M), (0, Kp - K)))
    if (Kp, Np) != (K, N):
        wt = jnp.pad(wt, ((0, Kp - K), (0, Np - N)))
    if has_bias:
        b2 = bias.astype(jnp.float32).reshape(1, N)
        if Np != N:
            b2 = jnp.pad(b2, ((0, 0), (0, Np - N)),
                         constant_values=(-1e30 if neg_pad else 0.0))

    grid = (Mp // tm_, Np // tn_, Kp // tk_)
    kernel = functools.partial(
        _linear_act_kernel, activation=activation, has_bias=has_bias)

    in_specs = [
        pl.BlockSpec((tm_, tk_), lambda i, j, k: (i, k)),  # x
        pl.BlockSpec((tk_, tn_), lambda i, j, k: (k, j)),  # W^T (K, N)
    ]
    operands = [x, wt]
    if has_bias:
        in_specs.append(pl.BlockSpec((1, tn_), lambda i, j, k: (0, j)))
        operands.append(b2)

    out = pl.pallas_call(
        kernel,
        out_shape=jax.ShapeDtypeStruct((Mp, Np), out_dtype),
        grid_spec=pltpu.PrefetchScalarGridSpec(
            num_scalar_prefetch=0,
            grid=grid,
            in_specs=in_specs,
            out_specs=pl.BlockSpec((tm_, tn_), lambda i, j, k: (i, j)),
            scratch_shapes=[pltpu.VMEM((tm_, tn_), jnp.float32)],
        ),
        compiler_params=pltpu.CompilerParams(
            # M leading + parallel: megacore-shardable on v7x (2 TCs);
            # near-neutral on single-TC v5e/v6e. K reduction last, arbitrary.
            dimension_semantics=("parallel", "parallel", "arbitrary"),
            vmem_limit_bytes=budget,
        ),
    )(*operands)

    if (Mp, Np) != (M, N):
        out = out[:M, :N]
    return out


# ---------------------------------------------------------------------------
# Pure-JAX reference matching the PyTorch module (default config).
# ---------------------------------------------------------------------------
def reference(x, weight, bias, activation="relu"):
    y = x.astype(jnp.float32) @ weight.astype(jnp.float32).T
    if bias is not None:
        y = y + bias.astype(jnp.float32)
    y = _apply_activation(y, activation)
    return y.astype(x.dtype)


if __name__ == "__main__":
    key = jax.random.PRNGKey(0)
    kx, kw, kb = jax.random.split(key, 3)

    # Small shapes consistent with the module: batch=16, in=256, out=128.
    M, K, N = 16, 256, 128
    x = jax.random.normal(kx, (M, K), dtype=jnp.float32)
    w = jax.random.normal(kw, (N, K), dtype=jnp.float32) * 0.05
    b = jax.random.normal(kb, (N,), dtype=jnp.float32) * 0.1

    # Hoisted weight transpose: done once at "parameter prep" time.
    wt = jnp.transpose(w)  # (K, N)

    # 1) f32 path; tk=128 -> 2-step K reduction exercising init/finalize.
    out = linear_norm_activation(x, wt, b, activation="relu",
                                 weight_transposed=True, tk=128)
    out = jax.block_until_ready(out)
    ref = reference(x, w, b, activation="relu")
    assert out.shape == (M, N)
    assert jnp.allclose(out, ref, atol=2e-2, rtol=2e-2), "f32 mismatch"

    # 2) bf16 MXU inputs + f32 accumulation (looser tolerance).
    out_bf = linear_norm_activation(x, wt, b, activation="relu",
                                    weight_transposed=True,
                                    compute_dtype=jnp.bfloat16, tk=128)
    out_bf = jax.block_until_ready(out_bf)
    assert jnp.allclose(out_bf, ref, atol=6e-2, rtol=6e-2), "bf16 mismatch"

    # 3) Unaligned shapes (padding path) + bias=None (bias operand dropped).
    M2, K2, N2 = 10, 200, 96
    x2 = jax.random.normal(kx, (M2, K2), dtype=jnp.float32)
    w2 = jax.random.normal(kw, (N2, K2), dtype=jnp.float32) * 0.05
    out2 = linear_norm_activation(x2, w2, None, activation="relu")
    out2 = jax.block_until_ready(out2)
    ref2 = reference(x2, w2, None, activation="relu")
    assert out2.shape == (M2, N2)
    assert jnp.allclose(out2, ref2, atol=2e-2, rtol=2e-2), "padded mismatch"

    # 4) Row-wise activation (softmax) with padded feature dim.
    out3 = linear_norm_activation(x2, w2, None, activation="softmax")
    out3 = jax.block_until_ready(out3)
    ref3 = reference(x2, w2, None, activation="softmax")
    assert jnp.allclose(out3, ref3, atol=1e-3, rtol=1e-3), "softmax mismatch"

    print("KERNEL_OK")
</pallas_src>

<mosaic_0001>
module attributes {stable_mosaic.version = 11 : i64} {
  func.func @_linear_act_kernel(%arg0: i32, %arg1: i32, %arg2: i32, %arg3: memref<16x128xf32, #tpu.memory_space<vmem>>, %arg4: memref<128x128xf32, #tpu.memory_space<vmem>>, %arg5: memref<1x128xf32, #tpu.memory_space<vmem>>, %arg6: memref<16x128xf32, #tpu.memory_space<vmem>>, %arg7: memref<16x128xf32, #tpu.memory_space<vmem>>) attributes {dimension_semantics = [#tpu.dimension_semantics<parallel>, #tpu.dimension_semantics<parallel>, #tpu.dimension_semantics<arbitrary>], iteration_bounds = array<i64: 1, 1, 2>, scalar_prefetch = 0 : i64, scratch_operands = 1 : i64, tpu.core_type = #tpu.core_type<tc>, window_params = [{transform_indices = @transform_0, window_bounds = array<i64: 16, 128>}, {transform_indices = @transform_1, window_bounds = array<i64: 128, 128>}, {transform_indices = @transform_2, window_bounds = array<i64: 1, 128>}, {transform_indices = @transform_3, window_bounds = array<i64: 16, 128>}]} {
    %c0_i32 = arith.constant 0 : i32
    %0 = arith.cmpi eq, %arg2, %c0_i32 : i32
    %1 = arith.extui %0 : i1 to i32
    %c0_i32_0 = arith.constant 0 : i32
    %2 = arith.cmpi ne, %1, %c0_i32_0 : i32
    scf.if %2 {
      %cst_9 = arith.constant 0.000000e+00 : f32
      %12 = vector.broadcast %cst_9 : f32 to vector<16x128xf32>
      %c0_10 = arith.constant 0 : index
      %c0_11 = arith.constant 0 : index
      %13 = vector.load %arg7[%c0_10, %c0_11] : memref<16x128xf32, #tpu.memory_space<vmem>>, vector<16x128xf32>
      tpu.vector_store %arg7[%c0_10, %c0_11], %12 {strides = array<i32>} : memref<16x128xf32, #tpu.memory_space<vmem>>, vector<16x128xf32>,
    } else {
    }
    %c0 = arith.constant 0 : index
    %c0_1 = arith.constant 0 : index
    %3 = vector.load %arg7[%c0, %c0_1] : memref<16x128xf32, #tpu.memory_space<vmem>>, vector<16x128xf32>
    %c0_2 = arith.constant 0 : index
    %c0_3 = arith.constant 0 : index
    %4 = vector.load %arg3[%c0_2, %c0_3] : memref<16x128xf32, #tpu.memory_space<vmem>>, vector<16x128xf32>
    %c0_4 = arith.constant 0 : index
    %c0_5 = arith.constant 0 : index
    %5 = vector.load %arg4[%c0_4, %c0_5] : memref<128x128xf32, #tpu.memory_space<vmem>>, vector<128x128xf32>
    %cst = arith.constant dense<0.000000e+00> : vector<16x128xf32>
    %6 = tpu.matmul %4, %5, %cst {dimension_numbers = #tpu.dot_dimension_numbers<[1], [0], [0], [1], [0, 0, 1, 1], [], []>} : vector<16x128xf32>, vector<128x128xf32>, vector<16x128xf32> -> vector<16x128xf32>
    %7 = arith.addf %3, %6 : vector<16x128xf32>
    %c0_6 = arith.constant 0 : index
    %c0_7 = arith.constant 0 : index
    %8 = vector.load %arg7[%c0_6, %c0_7] : memref<16x128xf32, #tpu.memory_space<vmem>>, vector<16x128xf32>
    tpu.vector_store %arg7[%c0_6, %c0_7], %7 {strides = array<i32>} : memref<16x128xf32, #tpu.memory_space<vmem>>, vector<16x128xf32>,
    %c1_i32 = arith.constant 1 : i32
    %9 = arith.cmpi eq, %arg2, %c1_i32 : i32
    %10 = arith.extui %9 : i1 to i32
    %c0_i32_8 = arith.constant 0 : i32
    %11 = arith.cmpi ne, %10, %c0_i32_8 : i32
    scf.if %11 {
      %c0_9 = arith.constant 0 : index
      %c0_10 = arith.constant 0 : index
      %12 = vector.load %arg7[%c0_9, %c0_10] : memref<16x128xf32, #tpu.memory_space<vmem>>, vector<16x128xf32>
      %c0_11 = arith.constant 0 : index
      %c0_12 = arith.constant 0 : index
      %13 = vector.load %arg5[%c0_11, %c0_12] : memref<1x128xf32, #tpu.memory_space<vmem>>, vector<1x128xf32>
      %14 = vector.broadcast %13 : vector<1x128xf32> to vector<16x128xf32>
      %15 = arith.addf %12, %14 : vector<16x128xf32>
      %cst_13 = arith.constant 0.000000e+00 : f32
      %16 = vector.broadcast %cst_13 : f32 to vector<16x128xf32>
      %17 = arith.maximumf %15, %16 : vector<16x128xf32>
      %c0_14 = arith.constant 0 : index
      %c0_15 = arith.constant 0 : index
      %18 = vector.load %arg6[%c0_14, %c0_15] : memref<16x128xf32, #tpu.memory_space<vmem>>, vector<16x128xf32>
      tpu.vector_store %arg6[%c0_14, %c0_15], %17 {strides = array<i32>} : memref<16x128xf32, #tpu.memory_space<vmem>>, vector<16x128xf32>,
    } else {
    }
    return
  }
  func.func @transform_0(%arg0: i32, %arg1: i32, %arg2: i32) -> (i32, i32) {
    %c0_i32 = arith.constant 0 : i32
    return %arg0, %arg2 : i32, i32
  }
  func.func @transform_1(%arg0: i32, %arg1: i32, %arg2: i32) -> (i32, i32) {
    %c0_i32 = arith.constant 0 : i32
    return %arg2, %arg1 : i32, i32
  }
  func.func @transform_2(%arg0: i32, %arg1: i32, %arg2: i32) -> (i32, i32) {
    %c0_i32 = arith.constant 0 : i32
    %c0_i32_0 = arith.constant 0 : i32
    return %c0_i32, %arg1 : i32, i32
  }
  func.func @transform_3(%arg0: i32, %arg1: i32, %arg2: i32) -> (i32, i32) {
    %c0_i32 = arith.constant 0 : i32
    return %arg0, %arg1 : i32, i32
  }
}

</mosaic_0001>

<llo_original>
// kernel: tpu_custom_call.1
$region0: #{tpu_custom_call.1}
  #allocation0 [shape = 'u32[]', space=smem, size = 0x4, offset = 0x4, fixed_abs, tag = 'smem constant byte address 0x4 - core index']
  #allocation1 [shape = 'u32[144,128]{1,0:T(1,128)}', space=vmem, size = 0x12000, scoped, tag = 'internal scratch']
  #allocation2 [shape = 'f32[16,128]{1,0:T(8,128)}', space=vmem, size = 0x2000, scoped, tag = 'scratch operand']
  %s0 = inlined_call_operand.hbm [shape: f32[16,256], index: 0, kind: input, shape index: {}]
  %s1 = inlined_call_operand.hbm [shape: f32[256,128], index: 1, kind: input, shape index: {}]
  %s2 = inlined_call_operand.vmem [shape: f32[1,128], index: 2, kind: input, shape index: {}]
  %s3 = inlined_call_operand.hbm [shape: f32[16,128], index: 3, kind: output, shape index: {}]
  %s4 = sld [smem:[#allocation0]]
  $region61: #{tpu_custom_call.1} parent=0
    _
  %s6 = ssub.s32 1, %s4
  %s7 = scalar_select 0, %s6, %s4
  $region1: #{tpu_custom_call.1} parent=0
    #allocation3 [shape = 'u8[16384]{0}', space=vmem, size = 0x4000, scoped, tag = 'input window, operand 0']
    #allocation4 [shape = 's32[2]{0}', space=sflag, size = 0x8, scoped, tag = 'scoped memory for tpu_custom_call.1']
    #allocation5 [shape = 's32[2]{0}', space=sflag, size = 0x8, scoped, tag = 'scoped memory for tpu_custom_call.1']
    #allocation6 [shape = 'u8[131072]{0}', space=vmem, size = 0x20000, scoped, tag = 'input window, operand 1']
    #allocation7 [shape = 's32[2]{0}', space=sflag, size = 0x8, scoped, tag = 'scoped memory for tpu_custom_call.1']
    #allocation8 [shape = 'u8[8192]{0}', space=vmem, size = 0x2000, scoped, tag = 'output window, operand 0, single buffered']
    %8 = vsyncpa [#allocation4], 0
    %s9 = scalar_lea.sflag [#allocation4], 1
    %10 = vsyncpa %s9, 0
    %11 = vsyncpa [#allocation7], 0
    %s12 = scalar_lea.sflag [#allocation7], 1
    %13 = vsyncpa %s12, 0
    %14 = vsyncpa [#allocation5], 0
    loop: start=0, step=1, limit=4
    $region2: #{tpu_custom_call.1} parent=1 // loop_pre_header
      _
    $region3: #{tpu_custom_call.1} parent=1 // loop_header
      %s16 = sphi 0, %s20
      %p17 = scmp.ge.s32.totalorder %s16, 4
      %s23 = sphi 0, %s42
      %s24 = sphi 0, %s38
      %s25 = sphi 0, %s34
      %s26 = sphi 0, %s23
      %s27 = sphi 0, %s24
      %s28 = sphi 0, %s25
      %s29 = sphi 0, %s26
      %s30 = sphi 0, %s27
      %s31 = sphi 0, %s28
      %s47 = sphi 0, %s49
      %s50 = sphi 0, %s47
      %s51 = sphi 0, %s50
      %s67 = sphi 0, %s51
      %s75 = sphi 0, %s77
      %s78 = sphi 0, %s75
      %s79 = sphi 0, %s78
      %s95 = sphi 0, %s79
      %s101 = sphi 0, %s103
      %s104 = sphi 0, %s101
      %s105 = sphi 0, %s104
      %s121 = sphi 0, %s105
      %s129 = sphi 0, %s131
      %s132 = sphi 0, %s129
      %s133 = sphi 0, %s132
      %s149 = sphi 0, %s133
    $region4: #{tpu_custom_call.1} parent=1 // loop_header_branch
      %19 = sbr.rel (%p17) target = $region8
    $region5: #{tpu_custom_call.1} parent=1 // loop_body
      %s21 = ssub.s32 %s16, 1
      %s22 = ssub.s32 %s16, 2
      %s32 = sadd.s32 1, %s25
      %p33 = scmp.ge.s32.totalorder %s32, 2
      %s34 = scalar_select %p33, 0, %s32
      %s35 = sadd.s32 1, %s24
      %s36 = scalar_select %p33, %s35, %s24
      %p37 = scmp.ge.s32.totalorder %s36, 1
      %s38 = scalar_select %p37, 0, %s36
      %s39 = sadd.s32 1, %s23
      %s40 = scalar_select %p37, %s39, %s23
      %p41 = scmp.ge.s32.totalorder %s40, 1
      %s42 = scalar_select %p41, 0, %s40
      %s43 = ssub.s32 %s23, %s42
      %s44 = ssub.s32 %s25, %s34
      %s45 = sor.u32 %s43, %s44
      %p46 = scmp.eq.s32.totalorder %s45, 0
      %s48 = sadd.s32 %s47, 1
      %s49 = scalar_select %p46, %s47, %s48
      %p52 = pneg %p46
      %p53 = scmp.eq.s32.totalorder %s16, 1
      %p54 = por %p52, %p53
      %p55 = scmp.ne.s32.totalorder %s47, %s50
      %p56 = scmp.eq.s32.totalorder %s16, 0
      %p57 = por %p55, %p56
      %p58 = scmp.ne.s32.totalorder %s47, %s50
      %p59 = scmp.eq.s32.totalorder %s21, 1
      %p60 = por %p58, %p59
      %p61 = scmp.ne.s32.totalorder %s50, %s51
      %p62 = scmp.eq.s32.totalorder %s21, 0
      %p63 = por %p61, %p62
      %p64 = scmp.ne.s32.totalorder %s50, %s51
      %p65 = scmp.eq.s32.totalorder %s22, 1
      %p66 = por %p64, %p65
      %p68 = scmp.ne.s32.totalorder %s51, %s67
      %p69 = scmp.eq.s32.totalorder %s22, 0
      %p70 = por %p68, %p69
      %s71 = ssub.s32 %s25, %s34
      %s72 = ssub.s32 %s24, %s38
      %s73 = sor.u32 %s71, %s72
      %p74 = scmp.eq.s32.totalorder %s73, 0
      %s76 = sadd.s32 %s75, 1
      %s77 = scalar_select %p74, %s75, %s76
      %p80 = pneg %p74
      %p81 = scmp.eq.s32.totalorder %s16, 1
      %p82 = por %p80, %p81
      %p83 = scmp.ne.s32.totalorder %s75, %s78
      %p84 = scmp.eq.s32.totalorder %s16, 0
      %p85 = por %p83, %p84
      %p86 = scmp.ne.s32.totalorder %s75, %s78
      %p87 = scmp.eq.s32.totalorder %s21, 1
      %p88 = por %p86, %p87
      %p89 = scmp.ne.s32.totalorder %s78, %s79
      %p90 = scmp.eq.s32.totalorder %s21, 0
      %p91 = por %p89, %p90
      %p92 = scmp.ne.s32.totalorder %s78, %s79
      %p93 = scmp.eq.s32.totalorder %s22, 1
      %p94 = por %p92, %p93
      %p96 = scmp.ne.s32.totalorder %s79, %s95
      %p97 = scmp.eq.s32.totalorder %s22, 0
      %p98 = por %p96, %p97
      %s99 = ssub.s32 %s24, %s38
      %p100 = scmp.eq.s32.totalorder %s99, 0
      %s102 = sadd.s32 %s101, 1
      %s103 = scalar_select %p100, %s101, %s102
      %p106 = pneg %p100
      %p107 = scmp.eq.s32.totalorder %s16, 1
      %p108 = por %p106, %p107
      %p109 = scmp.ne.s32.totalorder %s101, %s104
      %p110 = scmp.eq.s32.totalorder %s16, 0
      %p111 = por %p109, %p110
      %p112 = scmp.ne.s32.totalorder %s101, %s104
      %p113 = scmp.eq.s32.totalorder %s21, 1
      %p114 = por %p112, %p113
      %p115 = scmp.ne.s32.totalorder %s104, %s105
      %p116 = scmp.eq.s32.totalorder %s21, 0
      %p117 = por %p115, %p116
      %p118 = scmp.ne.s32.totalorder %s104, %s105
      %p119 = scmp.eq.s32.totalorder %s22, 1
      %p120 = por %p118, %p119
      %p122 = scmp.ne.s32.totalorder %s105, %s121
      %p123 = scmp.eq.s32.totalorder %s22, 0
      %p124 = por %p122, %p123
      %s125 = ssub.s32 %s23, %s42
      %s126 = ssub.s32 %s24, %s38
      %s127 = sor.u32 %s125, %s126
      %p128 = scmp.eq.s32.totalorder %s127, 0
      %s130 = sadd.s32 %s129, 1
      %s131 = scalar_select %p128, %s129, %s130
      %p134 = pneg %p128
      %p135 = scmp.eq.s32.totalorder %s16, 1
      %p136 = por %p134, %p135
      %p137 = scmp.ne.s32.totalorder %s129, %s132
      %p138 = scmp.eq.s32.totalorder %s16, 0
      %p139 = por %p137, %p138
      %p140 = scmp.ne.s32.totalorder %s129, %s132
      %p141 = scmp.eq.s32.totalorder %s21, 1
      %p142 = por %p140, %p141
      %p143 = scmp.ne.s32.totalorder %s132, %s133
      %p144 = scmp.eq.s32.totalorder %s21, 0
      %p145 = por %p143, %p144
      %p146 = scmp.ne.s32.totalorder %s132, %s133
      %p147 = scmp.eq.s32.totalorder %s22, 1
      %p148 = por %p146, %p147
      %p150 = scmp.ne.s32.totalorder %s133, %s149
      %p151 = scmp.eq.s32.totalorder %s22, 0
      %p152 = por %p150, %p151
      %p153 = scmp.le.s32.totalorder 1, %s16
      %p154 = scmp.lt.s32.totalorder %s16, 3
      %p155 = pnand %p153, %p154
      %p156 = pneg %p155
      // Predicated region
      $region9: #{tpu_custom_call.1} parent=5 // pred_check
        _
      $region10: #{tpu_custom_call.1} parent=5 // pred_check_branch
        %158 = sbr.rel (%p155) target = $region12
      $region11: #{tpu_custom_call.1} parent=5 // pred_region
        %s159 = ssub.s32 %s16, 1
        // Predicated region
        $region13: #{tpu_custom_call.1} parent=11 // pred_check
          %p160 = pneg %p117
        $region14: #{tpu_custom_call.1} parent=11 // pred_check_branch
          %162 = sbr.rel (%p160) target = $region16
        $region15: #{tpu_custom_call.1} parent=11 // pred_region
          %p163 = scmp.lt.s32.totalorder %s27, 0
          %s164 = scalar_select %p163, %s27, 0
          %s165 = scalar_lea.vmem %s2, %s164
        $region16: #{tpu_custom_call.1} parent=11 // pred_fallthru
          _
      $region12: #{tpu_custom_call.1} parent=5 // pred_fallthru
        _
      %p166 = scmp.lt.s32.totalorder %s16, 2
      // Predicated region
      $region17: #{tpu_custom_call.1} parent=5 // pred_check
        %p167 = pneg %p166
      $region18: #{tpu_custom_call.1} parent=5 // pred_check_branch
        %169 = sbr.rel (%p167) target = $region20
      $region19: #{tpu_custom_call.1} parent=5 // pred_region
        // Predicated region
        $region21: #{tpu_custom_call.1} parent=19 // pred_check
          %p170 = pneg %p57
        $region22: #{tpu_custom_call.1} parent=19 // pred_check_branch
          %172 = sbr.rel (%p170) target = $region24
        $region23: #{tpu_custom_call.1} parent=19 // pred_region
          %s173 = sand.u32 %s47, 1
          %s174 = scalar_lea.sflag [#allocation4], %s173
          %s175 = sand.u32 %s47, 1
          %s176 = smul.addr %s175, 16
          %s177 = scalar_lea.vmem [#allocation3], %s176
          %s178 = smul.u32 2, %s23
          %s180 = ssub.s32 256, 256
          %181 = vsyncadd %s174, %s180
          %s182 = smul.addr %s178, 2
          %s183 = sadd.s32 %s25, %s182
          %s184 = smul.addr %s183, 128
          %s185 = scalar_lea.hbm %s0, %s184
          %s186 = sshll.u32 %s177, 4
          %s187 = int_to_ptr.vmem [resolvable:$true] %s186
          %192 = dma.hbm_to_vmem [thread:$0]  %s185, 256, %s187, %s174, 256, 128, 8
        $region24: #{tpu_custom_call.1} parent=19 // pred_fallthru
          _
        // Predicated region
        $region25: #{tpu_custom_call.1} parent=19 // pred_check
          %p193 = pneg %p85
        $region26: #{tpu_custom_call.1} parent=19 // pred_check_branch
          %195 = sbr.rel (%p193) target = $region28
        $region27: #{tpu_custom_call.1} parent=19 // pred_region
          %s196 = sand.u32 %s75, 1
          %s197 = scalar_lea.sflag [#allocation7], %s196
          %s198 = sand.u32 %s75, 1
          %s199 = smul.addr %s198, 128
          %s200 = scalar_lea.vmem [#allocation6], %s199
          %s201 = smul.u32 16, %s25
          %s203 = ssub.s32 2048, 2048
          %204 = vsyncadd %s197, %s203
          %s205 = sadd.s32 %s24, %s201
          %s206 = smul.addr %s205, 128
          %s207 = scalar_lea.hbm %s1, %s206
          %s208 = sshll.u32 %s200, 4
          %s209 = int_to_ptr.vmem [resolvable:$true] %s208
          %214 = dma.hbm_to_vmem [thread:$0]  %s207, 2048, %s209, %s197, 128, 128, 8
        $region28: #{tpu_custom_call.1} parent=19 // pred_fallthru
          _
      $region20: #{tpu_custom_call.1} parent=5 // pred_fallthru
        _
      %p215 = scmp.le.s32.totalorder 1, %s16
      %p216 = scmp.lt.s32.totalorder %s16, 3
      %p217 = pnand %p215, %p216
      %p218 = pneg %p217
      // Predicated region
      $region29: #{tpu_custom_call.1} parent=5 // pred_check
        _
      $region30: #{tpu_custom_call.1} parent=5 // pred_check_branch
        %220 = sbr.rel (%p217) target = $region32
      $region31: #{tpu_custom_call.1} parent=5 // pred_region
        %s221 = ssub.s32 %s16, 1
        %s222 = sand.u32 %s50, 1
        %s223 = scalar_lea.sflag [#allocation4], %s222
        %s224 = sand.u32 %s50, 1
        %s225 = smul.addr %s224, 16
        %s226 = scalar_lea.vmem [#allocation3], %s225
        // Predicated region
        $region33: #{tpu_custom_call.1} parent=31 // pred_check
          %p227 = pneg %p63
        $region34: #{tpu_custom_call.1} parent=31 // pred_check_branch
          %229 = sbr.rel (%p227) target = $region36
        $region35: #{tpu_custom_call.1} parent=31 // pred_region
          %230 = dma.done %s223, 256
        $region36: #{tpu_custom_call.1} parent=31 // pred_fallthru
          _
        %s231 = sand.u32 %s78, 1
        %s232 = scalar_lea.sflag [#allocation7], %s231
        %s233 = sand.u32 %s78, 1
        %s234 = smul.addr %s233, 128
        %s235 = scalar_lea.vmem [#allocation6], %s234
        // Predicated region
        $region37: #{tpu_custom_call.1} parent=31 // pred_check
          %p236 = pneg %p91
        $region38: #{tpu_custom_call.1} parent=31 // pred_check_branch
          %238 = sbr.rel (%p236) target = $region40
        $region39: #{tpu_custom_call.1} parent=31 // pred_region
          %239 = dma.done %s232, 2048
        $region40: #{tpu_custom_call.1} parent=31 // pred_fallthru
          _
        %s240 = sand.u32 %s50, 1
        %s241 = scalar_lea.sflag [#allocation4], %s240
        %s242 = sand.u32 %s50, 1
        %s243 = smul.addr %s242, 16
        %s244 = scalar_lea.vmem [#allocation3], %s243
        %p245 = pneg %p63
        %p246 = pneg %p60
        %s247 = sand.u32 %s78, 1
        %s248 = scalar_lea.sflag [#allocation7], %s247
        %s249 = sand.u32 %s78, 1
        %s250 = smul.addr %s249, 128
        %s251 = scalar_lea.vmem [#allocation6], %s250
        %p252 = pneg %p91
        %p253 = pneg %p88
        %p254 = scmp.lt.s32.totalorder %s27, 0
        %s255 = scalar_select %p254, %s27, 0
        %s256 = scalar_lea.vmem %s2, %s255
        %p257 = pneg %p117
        %p258 = pneg %p114
        %p259 = pneg %p145
        %p260 = pneg %p142
        %s261 = smul.u32 2, %s26
        %s262 = smul.u32 16, %s28
        %p263 = scmp.lt.s32.totalorder %s27, 0
        %s264 = scalar_select %p263, %s27, 0
        %s265 = scalar_lea.vmem %s2, %s264
        %s266 = smul.u32 2, %s26
        %p267 = scmp.eq.s32.totalorder %s28, 0
        // Predicated region
        $region41: #{tpu_custom_call.1} parent=31 // pred_check
          %p268 = pneg %p267
        $region42: #{tpu_custom_call.1} parent=31 // pred_check_branch
          %270 = sbr.rel (%p268) target = $region44
        $region43: #{tpu_custom_call.1} parent=31 // pred_region
          %271 = vst [vmem:[#allocation2] sm:$0xff] 0.0
          %272 = vst [vmem:[#allocation2 + $0x8] sm:$0xff] 0.0
        $region44: #{tpu_custom_call.1} parent=31 // pred_fallthru
          _
        %v273 = vld [vmem:[#allocation2] sm:$0xff]
        %v274 = vld [vmem:[#allocation2 + $0x8] sm:$0xff]
        %v275 = vld [vmem:[%s226] sm:$0xff]
        %v276 = vld [vmem:[%s226 + $0x8] sm:$0xff]
        %v277 = vld [vmem:[%s235] sm:$0xff]
        %v278 = vld [vmem:[%s235 + $0x8] sm:$0xff]
        %v279 = vld [vmem:[%s235 + $0x10] sm:$0xff]
        %v280 = vld [vmem:[%s235 + $0x18] sm:$0xff]
        %v281 = vld [vmem:[%s235 + $0x20] sm:$0xff]
        %v282 = vld [vmem:[%s235 + $0x28] sm:$0xff]
        %v283 = vld [vmem:[%s235 + $0x30] sm:$0xff]
        %v284 = vld [vmem:[%s235 + $0x38] sm:$0xff]
        %v285 = vld [vmem:[%s235 + $0x40] sm:$0xff]
        %v286 = vld [vmem:[%s235 + $0x48] sm:$0xff]
        %v287 = vld [vmem:[%s235 + $0x50] sm:$0xff]
        %v288 = vld [vmem:[%s235 + $0x58] sm:$0xff]
        %v289 = vld [vmem:[%s235 + $0x60] sm:$0xff]
        %v290 = vld [vmem:[%s235 + $0x68] sm:$0xff]
        %v291 = vld [vmem:[%s235 + $0x70] sm:$0xff]
        %v292 = vld [vmem:[%s235 + $0x78] sm:$0xff]
        %293 = vmatprep.subr.mxu0 0.0
        %294 = vmatpush1.msra.mxu0 %v292
        %295 = vmatprep.subr.mxu0 0.0
        %296 = vmatpush1.msra.mxu0 %v291
        %297 = vmatprep.subr.mxu0 0.0
        %298 = vmatpush1.msra.mxu0 %v290
        %299 = vmatprep.subr.mxu0 0.0
        %300 = vmatpush1.msra.mxu0 %v289
        %301 = vmatprep.subr.mxu0 0.0
        %302 = vmatpush1.msra.mxu0 %v288
        %303 = vmatprep.subr.mxu0 0.0
        %304 = vmatpush1.msra.mxu0 %v287
        %305 = vmatprep.subr.mxu0 0.0
        %306 = vmatpush1.msra.mxu0 %v286
        %307 = vmatprep.subr.mxu0 0.0
        %308 = vmatpush1.msra.mxu0 %v285
        %309 = vmatprep.subr.mxu0 0.0
        %310 = vmatpush1.msra.mxu0 %v284
        %311 = vmatprep.subr.mxu0 0.0
        %312 = vmatpush1.msra.mxu0 %v283
        %313 = vmatprep.subr.mxu0 0.0
        %314 = vmatpush1.msra.mxu0 %v282
        %315 = vmatprep.subr.mxu0 0.0
        %316 = vmatpush1.msra.mxu0 %v281
        %317 = vmatprep.subr.mxu0 0.0
        %318 = vmatpush1.msra.mxu0 %v280
        %319 = vmatprep.subr.mxu0 0.0
        %320 = vmatpush1.msra.mxu0 %v279
        %321 = vmatprep.subr.mxu0 0.0
        %322 = vmatpush1.msra.mxu0 %v278
        %323 = vmatprep.subr.mxu0 0.0
        %324 = vmatpush1.msra.mxu0 %v277
        %325 = vmatprep.subr.mxu0 0.0
        %326 = vmatpush2.msra.mxu0 0.0
        %327 = vmatprep.subr.mxu0 0.0
        %328 = vmatpush2.msra.mxu0 0.0
        %329 = vmatprep.subr.mxu0 0.0
        %330 = vmatpush2.msra.mxu0 0.0
        %331 = vmatprep.subr.mxu0 0.0
        %332 = vmatpush2.msra.mxu0 0.0
        %333 = vmatprep.subr.mxu0 0.0
        %334 = vmatpush2.msra.mxu0 0.0
        %335 = vmatprep.subr.mxu0 0.0
        %336 = vmatpush2.msra.mxu0 0.0
        %337 = vmatprep.subr.mxu0 0.0
        %338 = vmatpush2.msra.mxu0 0.0
        %339 = vmatprep.subr.mxu0 0.0
        %340 = vmatpush2.msra.mxu0 0.0
        %341 = vmatprep.subr.mxu0 0.0
        %342 = vmatpush2.msra.mxu0 0.0
        %343 = vmatprep.subr.mxu0 0.0
        %344 = vmatpush2.msra.mxu0 0.0
        %345 = vmatprep.subr.mxu0 0.0
        %346 = vmatpush2.msra.mxu0 0.0
        %347 = vmatprep.subr.mxu0 0.0
        %348 = vmatpush2.msra.mxu0 0.0
        %349 = vmatprep.subr.mxu0 0.0
        %350 = vmatpush2.msra.mxu0 0.0
        %351 = vmatprep.subr.mxu0 0.0
        %352 = vmatpush2.msra.mxu0 0.0
        %353 = vmatprep.subr.mxu0 0.0
        %354 = vmatpush2.msra.mxu0 0.0
        %355 = vmatprep.subr.mxu0 0.0
        %356 = vmatpush2.msra.mxu0 0.0
        %357 = vmatprep.mubr.f32.mxu0 0.0
        %358 = vmatmul.mubr.f32.gmra.mxu0 %v275
        %v359 = vpop.f32.mrf.mxu0
        %v360 = vadd.f32 0.0, %v359
        %v361 = vpop.f32.mrf.mxu0
        %362 = vmatprep.mubr.f32.mxu0 0.0
        %363 = vmatmul.mubr.f32.gmra.mxu0 %v276
        %v364 = vpop.f32.mrf.mxu0
        %v365 = vadd.f32 0.0, %v364
        %v366 = vpop.f32.mrf.mxu0
        %367 = vdwg.mxu0
        %v368 = vadd.f32 %v273, %v360
        %v369 = vadd.f32 %v274, %v365
        %370 = vst [vmem:[#allocation2] sm:$0xff] %v368
        %371 = vst [vmem:[#allocation2 + $0x8] sm:$0xff] %v369
        %p372 = scmp.eq.s32.totalorder %s28, 1
        // Predicated region
        $region45: #{tpu_custom_call.1} parent=31 // pred_check
          %p373 = pneg %p372
        $region46: #{tpu_custom_call.1} parent=31 // pred_check_branch
          %375 = sbr.rel (%p373) target = $region48
        $region47: #{tpu_custom_call.1} parent=31 // pred_region
          %v376 = vld [vmem:[#allocation2] sm:$0xff]
          %v377 = vld [vmem:[#allocation2 + $0x8] sm:$0xff]
          %v378 = vld [vmem:[%s265] sm:$0x1]
          %v380 = vlaneseq
          %v381 = vshrl.u32 %v380, 7
          %v382 = vsub.s32 0, %v381
          %v383 = vrot.slane %v378, %v382
          %v385 = vadd.f32 %v376, %v383
          %v386 = vadd.f32 %v377, %v383
          %v387 = vmax.f32 %v385, 0.0
          %v388 = vmax.f32 %v386, 0.0
          %389 = vst [vmem:[#allocation8] sm:$0xff] %v387
          %390 = vst [vmem:[#allocation8 + $0x8] sm:$0xff] %v388
        $region48: #{tpu_custom_call.1} parent=31 // pred_fallthru
          _
        // Predicated region
        $region49: #{tpu_custom_call.1} parent=31 // pred_check
          %p391 = pneg %p142
        $region50: #{tpu_custom_call.1} parent=31 // pred_check_branch
          %393 = sbr.rel (%p391) target = $region52
        $region51: #{tpu_custom_call.1} parent=31 // pred_region
          %s394 = smul.u32 2, %s26
          %s396 = ssub.s32 256, 256
          %397 = vsyncadd [#allocation5], %s396
          %s398 = sadd.s32 %s27, %s394
          %s399 = smul.addr %s398, 128
          %s400 = scalar_lea.hbm %s3, %s399
          %s401 = sshll.u32 [#allocation8], 4
          %s402 = int_to_ptr.vmem [resolvable:$true] %s401
          %407 = dma.vmem_to_hbm [thread:$0]  %s402, 256, %s400, [#allocation5], 128, 128, 8
        $region52: #{tpu_custom_call.1} parent=31 // pred_fallthru
          _
        // Predicated region
        $region53: #{tpu_custom_call.1} parent=31 // pred_check
          %p408 = pneg %p142
        $region54: #{tpu_custom_call.1} parent=31 // pred_check_branch
          %410 = sbr.rel (%p408) target = $region56
        $region55: #{tpu_custom_call.1} parent=31 // pred_region
          %411 = dma.done [#allocation5], 256
        $region56: #{tpu_custom_call.1} parent=31 // pred_fallthru
          _
      $region32: #{tpu_custom_call.1} parent=5 // pred_fallthru
        _
      %p412 = scmp.le.s32.totalorder 2, %s16
      // Predicated region
      $region57: #{tpu_custom_call.1} parent=5 // pred_check
        %p413 = pneg %p412
      $region58: #{tpu_custom_call.1} parent=5 // pred_check_branch
        %415 = sbr.rel (%p413) target = $region60
      $region59: #{tpu_custom_call.1} parent=5 // pred_region
        %s416 = ssub.s32 %s16, 2
      $region60: #{tpu_custom_call.1} parent=5 // pred_fallthru
        _
    $region6: #{tpu_custom_call.1} parent=1 // loop_footer
      %s20 = sadd.s32 1, %s16
    $region7: #{tpu_custom_call.1} parent=1 // loop_footer_branch
      %15 = sbr.rel target = $region3
    $region8: #{tpu_custom_call.1} parent=1 // loop_exit
      _
    %417 = vsyncpa [#allocation4], 1
    %s418 = scalar_lea.sflag [#allocation4], 1
    %419 = vsyncpa %s418, 1
    %420 = vsyncpa [#allocation7], 1
    %s421 = scalar_lea.sflag [#allocation7], 1
    %422 = vsyncpa %s421, 1
    %423 = vsyncpa [#allocation5], 1
    %s424 = scalar_lea.sflag [#allocation5], 1
    %425 = vsyncpa %s424, 1

</llo_original>
